<compile_context>
chip_gen: v6e
topology: v6e:2x2x1
jax: 0.10.0
libtpu: 0.0.40
codegen_flags: <defaults>
</compile_context>

<pallas_src>
import functools
import math

import jax
import jax.numpy as jnp
from jax.experimental import pallas as pl
from jax.experimental.pallas import tpu as pltpu


def _make_rope_kernel(half: int, block_sd: int):
    """Build the RoPE kernel for blocks of shape (TBH, TSD).

    q/k/qo/ko refs: (TBH, TSD); cos/sin_lo/sin_hi refs: (1, TSD), float32.
    sin_lo = -sin at positions j <  D/2 (0 elsewhere)  -> multiplies x[p+D/2]
    sin_hi = +sin at positions j >= D/2 (0 elsewhere)  -> multiplies x[p-D/2]
    Roll wrap-around only hits positions where the matching table is 0
    (guaranteed because TSD is a multiple of D and divides S*D exactly).
    """

    def kernel(q_ref, k_ref, cos_ref, slo_ref, shi_ref, qo_ref, ko_ref):
        cos = cos_ref[...]        # (1, TSD) f32
        sin_lo = slo_ref[...]     # (1, TSD) f32
        sin_hi = shi_ref[...]     # (1, TSD) f32

        def apply(x_ref, o_ref):
            x = x_ref[...].astype(jnp.float32)
            # position p sees x[p - half]  (valid contribution where j >= D/2)
            x_dn = pltpu.roll(x, shift=half, axis=1)
            # position p sees x[p + half]  (valid contribution where j < D/2)
            x_up = pltpu.roll(x, shift=block_sd - half, axis=1)
            o_ref[...] = (x * cos + x_up * sin_lo + x_dn * sin_hi).astype(o_ref.dtype)

        apply(q_ref, qo_ref)
        apply(k_ref, ko_ref)

    return kernel


def _vmem_budgets():
    """Generation-aware VMEM sizing: (data-block budget, Mosaic vmem limit)."""
    vmem_bytes = 64 * 1024 * 1024          # conservative default (v7x-sized)
    try:
        info = pltpu.get_tpu_info()
        vmem_bytes = int(getattr(info, "vmem_capacity_bytes", vmem_bytes))
    except Exception:
        pass
    if vmem_bytes >= 96 * 1024 * 1024:     # v5e / v6e: 128 MiB VMEM
        return 48 * 1024 * 1024, 96 * 1024 * 1024
    return 20 * 1024 * 1024, 48 * 1024 * 1024   # v7x: 64 MiB VMEM


def _choose_tiles(bh, s, d, itemsize, sublane, data_budget, min_steps=8):
    """Pick (tbh, tsd) block sizes for the flattened (BH, S*D) layout.

    Constraints:
      * tsd is a multiple of D (roll-wrap trick) and of 128 (lanes) and divides
        S*D exactly (no partial SD blocks -> no stale padding leaking through
        the rolls).
      * tbh is the full BH extent or a multiple of the dtype's sublane tile.
      * 4 data arrays (q,k in + q,k out), double-buffered -> 8 * block bytes
        within the data budget.
      * prefer the largest block that still yields >= min_steps grid steps
        (two v7x TensorCores + pipeline overlap on every generation).
    """
    sd = s * d
    unit = (d * 128) // math.gcd(d, 128)

    sd_tiles = [sd]
    if sd % unit == 0:
        n_units = sd // unit
        for c in range(1, n_units):
            if n_units % c == 0:
                sd_tiles.append(c * unit)
    sd_tiles = sorted(set(sd_tiles), reverse=True)   # largest first

    def round_up(x, m):
        return -(-x // m) * m

    best = None   # (capped_steps, tbh, tsd)
    for tsd in sd_tiles:
        max_rows = data_budget // (8 * tsd * itemsize)
        if bh <= max_rows:
            tbh = bh
        else:
            tbh = (max_rows // sublane) * sublane
            if tbh == 0:
                continue
        n_sd = sd // tsd
        # Shrink tbh toward sublane granularity so the grid has >= min_steps
        # total steps whenever the BH axis allows it.
        if n_sd < min_steps and bh > sublane:
            want_bh_steps = -(-min_steps // n_sd)
            tbh_target = round_up(-(-bh // want_bh_steps), sublane)
            tbh = max(sublane, min(tbh, tbh_target))
        tbh = min(tbh, bh)
        steps = (-(-bh // tbh)) * n_sd
        key = min(steps, min_steps)
        if best is None or key > best[0]:
            best = (key, tbh, tsd)
        if steps >= min_steps:
            break

    if best is None:
        # Rows too long to chunk within budget (S*D not divisible by
        # lcm(D, 128)); fall back to full-SD rows with a minimal sublane block.
        # TODO(synk): add an in-kernel lane mask to allow non-divisible SD chunks.
        return min(bh, sublane), sd
    return best[1], best[2]


@functools.lru_cache(maxsize=32)
def _rope_tables(s: int, d: int):
    """cos / masked-signed sin tables, flattened to (1, S*D), float32. Cached."""
    half = d // 2
    inv_freq = 1.0 / (10000.0 ** (jnp.arange(0, d, 2, dtype=jnp.float32) / d))  # [D/2]
    t = jnp.arange(s, dtype=jnp.float32)
    freqs = jnp.outer(t, inv_freq)                                              # [S, D/2]
    emb = jnp.concatenate([freqs, freqs], axis=-1)                              # [S, D]
    cos = jnp.cos(emb)
    sin = jnp.sin(emb)
    # Fold rotate_half's sign and half-selection into the sin tables.
    lo = (jnp.arange(d) < half)[None, :]                                        # [1, D]
    sin_lo = jnp.where(lo, -sin, 0.0)
    sin_hi = jnp.where(lo, 0.0, sin)
    sd = s * d
    return (cos.reshape(1, sd).astype(jnp.float32),
            sin_lo.reshape(1, sd).astype(jnp.float32),
            sin_hi.reshape(1, sd).astype(jnp.float32))


def rotary_embedding(q, k):
    """Apply ESM rotary position embeddings to q and k of shape [B, H, S, D]."""
    B, H, S, D = q.shape
    assert k.shape == (B, H, S, D)
    assert D % 2 == 0
    half = D // 2
    BH, SD = B * H, S * D

    cos_f, sin_lo_f, sin_hi_f = _rope_tables(S, D)

    # Lane-dense layout: fuse (S, D) into one wide last axis (free reshape).
    qf = q.reshape(BH, SD)
    kf = k.reshape(BH, SD)

    itemsize = jnp.dtype(q.dtype).itemsize
    sublane = {1: 32, 2: 16, 4: 8}.get(itemsize, 8)     # native sublane tile
    data_budget, vmem_limit = _vmem_budgets()
    tbh, tsd = _choose_tiles(BH, S, D, itemsize, sublane, data_budget)
    # The roll trick and the "no partial SD block" guarantee both depend on this.
    assert tsd % D == 0 and SD % tsd == 0

    n_bh = pl.cdiv(BH, tbh)
    n_sd = SD // tsd

    data_spec = pl.BlockSpec((tbh, tsd), lambda j, i: (i, j))
    tbl_spec = pl.BlockSpec((1, tsd), lambda j, i: (0, j))

    qo, ko = pl.pallas_call(
        _make_rope_kernel(half, tsd),
        out_shape=(
            jax.ShapeDtypeStruct((BH, SD), q.dtype),
            jax.ShapeDtypeStruct((BH, SD), k.dtype),
        ),
        grid_spec=pltpu.PrefetchScalarGridSpec(
            num_scalar_prefetch=0,
            grid=(n_sd, n_bh),  # BH innermost so the resident table block is reused
            in_specs=[data_spec, data_spec, tbl_spec, tbl_spec, tbl_spec],
            out_specs=(data_spec, data_spec),
        ),
        # RoPE is a pure overwrite of q/k: alias them to the outputs.
        input_output_aliases={0: 0, 1: 1},
        compiler_params=pltpu.CompilerParams(
            dimension_semantics=("parallel", "parallel"),
            vmem_limit_bytes=vmem_limit,
        ),
    )(qf, kf, cos_f, sin_lo_f, sin_hi_f)

    return qo.reshape(B, H, S, D), ko.reshape(B, H, S, D)


# ---- pure-JAX reference (mirrors the PyTorch module exactly) ----
def _rotate_half_ref(x):
    x1, x2 = jnp.split(x, 2, axis=-1)
    return jnp.concatenate([-x2, x1], axis=-1)


def _rope_ref(q, k):
    B, H, S, D = k.shape
    inv_freq = 1.0 / (10000.0 ** (jnp.arange(0, D, 2, dtype=jnp.float32) / D))
    t = jnp.arange(S, dtype=jnp.float32)
    freqs = jnp.outer(t, inv_freq)
    emb = jnp.concatenate([freqs, freqs], axis=-1)
    cos = jnp.cos(emb)[None, None, :, :]
    sin = jnp.sin(emb)[None, None, :, :]
    qo = (q * cos + _rotate_half_ref(q) * sin).astype(q.dtype)
    ko = (k * cos + _rotate_half_ref(k) * sin).astype(k.dtype)
    return qo, ko


if __name__ == "__main__":
    key = jax.random.PRNGKey(0)
    kq, kk = jax.random.split(key)
    B, H, S, D = 2, 4, 16, 64
    q = jax.random.normal(kq, (B, H, S, D), dtype=jnp.float32)
    k = jax.random.normal(kk, (B, H, S, D), dtype=jnp.float32)

    q_out, k_out = rotary_embedding(q, k)
    jax.block_until_ready((q_out, k_out))

    q_ref, k_ref = _rope_ref(q, k)
    assert q_out.dtype == q.dtype and k_out.dtype == k.dtype
    assert jnp.allclose(q_out, q_ref, atol=1e-5, rtol=1e-5)
    assert jnp.allclose(k_out, k_ref, atol=1e-5, rtol=1e-5)

    print("KERNEL_OK")
</pallas_src>

<mosaic_0001>
module attributes {stable_mosaic.version = 11 : i64} {
  func.func @kernel(%arg0: i32, %arg1: i32, %arg2: memref<8x128xf32, #tpu.memory_space<vmem>>, %arg3: memref<8x128xf32, #tpu.memory_space<vmem>>, %arg4: memref<1x128xf32, #tpu.memory_space<vmem>>, %arg5: memref<1x128xf32, #tpu.memory_space<vmem>>, %arg6: memref<1x128xf32, #tpu.memory_space<vmem>>, %arg7: memref<8x128xf32, #tpu.memory_space<vmem>>, %arg8: memref<8x128xf32, #tpu.memory_space<vmem>>) attributes {dimension_semantics = [#tpu.dimension_semantics<parallel>, #tpu.dimension_semantics<parallel>], iteration_bounds = array<i64: 8, 1>, scalar_prefetch = 0 : i64, scratch_operands = 0 : i64, tpu.core_type = #tpu.core_type<tc>, window_params = [{transform_indices = @transform_0, window_bounds = array<i64: 8, 128>}, {transform_indices = @transform_1, window_bounds = array<i64: 8, 128>}, {transform_indices = @transform_2, window_bounds = array<i64: 1, 128>}, {transform_indices = @transform_3, window_bounds = array<i64: 1, 128>}, {transform_indices = @transform_4, window_bounds = array<i64: 1, 128>}, {transform_indices = @transform_5, window_bounds = array<i64: 8, 128>}, {transform_indices = @transform_6, window_bounds = array<i64: 8, 128>}]} {
    %c0 = arith.constant 0 : index
    %c0_0 = arith.constant 0 : index
    %0 = vector.load %arg4[%c0, %c0_0] : memref<1x128xf32, #tpu.memory_space<vmem>>, vector<1x128xf32>
    %c0_1 = arith.constant 0 : index
    %c0_2 = arith.constant 0 : index
    %1 = vector.load %arg5[%c0_1, %c0_2] : memref<1x128xf32, #tpu.memory_space<vmem>>, vector<1x128xf32>
    %c0_3 = arith.constant 0 : index
    %c0_4 = arith.constant 0 : index
    %2 = vector.load %arg6[%c0_3, %c0_4] : memref<1x128xf32, #tpu.memory_space<vmem>>, vector<1x128xf32>
    %c0_5 = arith.constant 0 : index
    %c0_6 = arith.constant 0 : index
    %3 = vector.load %arg2[%c0_5, %c0_6] : memref<8x128xf32, #tpu.memory_space<vmem>>, vector<8x128xf32>
    %c32_i32 = arith.constant 32 : i32
    %4 = tpu.dynamic_rotate %3 by %c32_i32 dim 1 : vector<8x128xf32>, i32 -> vector<8x128xf32>
    %c96_i32 = arith.constant 96 : i32
    %5 = tpu.dynamic_rotate %3 by %c96_i32 dim 1 : vector<8x128xf32>, i32 -> vector<8x128xf32>
    %6 = vector.broadcast %0 : vector<1x128xf32> to vector<8x128xf32>
    %7 = arith.mulf %3, %6 : vector<8x128xf32>
    %8 = vector.broadcast %1 : vector<1x128xf32> to vector<8x128xf32>
    %9 = arith.mulf %5, %8 : vector<8x128xf32>
    %10 = arith.addf %7, %9 : vector<8x128xf32>
    %11 = vector.broadcast %2 : vector<1x128xf32> to vector<8x128xf32>
    %12 = arith.mulf %4, %11 : vector<8x128xf32>
    %13 = arith.addf %10, %12 : vector<8x128xf32>
    %c0_7 = arith.constant 0 : index
    %c0_8 = arith.constant 0 : index
    %14 = vector.load %arg7[%c0_7, %c0_8] : memref<8x128xf32, #tpu.memory_space<vmem>>, vector<8x128xf32>
    tpu.vector_store %arg7[%c0_7, %c0_8], %13 {strides = array<i32>} : memref<8x128xf32, #tpu.memory_space<vmem>>, vector<8x128xf32>,
    %c0_9 = arith.constant 0 : index
    %c0_10 = arith.constant 0 : index
    %15 = vector.load %arg3[%c0_9, %c0_10] : memref<8x128xf32, #tpu.memory_space<vmem>>, vector<8x128xf32>
    %c32_i32_11 = arith.constant 32 : i32
    %16 = tpu.dynamic_rotate %15 by %c32_i32_11 dim 1 : vector<8x128xf32>, i32 -> vector<8x128xf32>
    %c96_i32_12 = arith.constant 96 : i32
    %17 = tpu.dynamic_rotate %15 by %c96_i32_12 dim 1 : vector<8x128xf32>, i32 -> vector<8x128xf32>
    %18 = vector.broadcast %0 : vector<1x128xf32> to vector<8x128xf32>
    %19 = arith.mulf %15, %18 : vector<8x128xf32>
    %20 = vector.broadcast %1 : vector<1x128xf32> to vector<8x128xf32>
    %21 = arith.mulf %17, %20 : vector<8x128xf32>
    %22 = arith.addf %19, %21 : vector<8x128xf32>
    %23 = vector.broadcast %2 : vector<1x128xf32> to vector<8x128xf32>
    %24 = arith.mulf %16, %23 : vector<8x128xf32>
    %25 = arith.addf %22, %24 : vector<8x128xf32>
    %c0_13 = arith.constant 0 : index
    %c0_14 = arith.constant 0 : index
    %26 = vector.load %arg8[%c0_13, %c0_14] : memref<8x128xf32, #tpu.memory_space<vmem>>, vector<8x128xf32>
    tpu.vector_store %arg8[%c0_13, %c0_14], %25 {strides = array<i32>} : memref<8x128xf32, #tpu.memory_space<vmem>>, vector<8x128xf32>,
    return
  }
  func.func @transform_0(%arg0: i32, %arg1: i32) -> (i32, i32) {
    %c0_i32 = arith.constant 0 : i32
    return %arg1, %arg0 : i32, i32
  }
  func.func @transform_1(%arg0: i32, %arg1: i32) -> (i32, i32) {
    %c0_i32 = arith.constant 0 : i32
    return %arg1, %arg0 : i32, i32
  }
  func.func @transform_2(%arg0: i32, %arg1: i32) -> (i32, i32) {
    %c0_i32 = arith.constant 0 : i32
    %c0_i32_0 = arith.constant 0 : i32
    return %c0_i32, %arg0 : i32, i32
  }
  func.func @transform_3(%arg0: i32, %arg1: i32) -> (i32, i32) {
    %c0_i32 = arith.constant 0 : i32
    %c0_i32_0 = arith.constant 0 : i32
    return %c0_i32, %arg0 : i32, i32
  }
  func.func @transform_4(%arg0: i32, %arg1: i32) -> (i32, i32) {
    %c0_i32 = arith.constant 0 : i32
    %c0_i32_0 = arith.constant 0 : i32
    return %c0_i32, %arg0 : i32, i32
  }
  func.func @transform_5(%arg0: i32, %arg1: i32) -> (i32, i32) {
    %c0_i32 = arith.constant 0 : i32
    return %arg1, %arg0 : i32, i32
  }
  func.func @transform_6(%arg0: i32, %arg1: i32) -> (i32, i32) {
    %c0_i32 = arith.constant 0 : i32
    return %arg1, %arg0 : i32, i32
  }
}

</mosaic_0001>

<llo_original>
// kernel: tpu_custom_call.1
$region0: #{tpu_custom_call.1}
  #allocation0 [shape = 'u32[]', space=smem, size = 0x4, offset = 0x4, fixed_abs, tag = 'smem constant byte address 0x4 - core index']
  #allocation1 [shape = 'u32[144,128]{1,0:T(1,128)}', space=vmem, size = 0x12000, scoped, tag = 'internal scratch']
  %s0 = inlined_call_operand.hbm [shape: f32[8,1024], index: 0, kind: input, shape index: {}, may-alias: {0,5}]
  %s1 = inlined_call_operand.hbm [shape: f32[8,1024], index: 1, kind: input, shape index: {}, may-alias: {1,6}]
  %s2 = inlined_call_operand.vmem [shape: f32[1,1024], index: 2, kind: input, shape index: {}]
  %s3 = inlined_call_operand.vmem [shape: f32[1,1024], index: 3, kind: input, shape index: {}]
  %s4 = inlined_call_operand.vmem [shape: f32[1,1024], index: 4, kind: input, shape index: {}]
  %s5 = inlined_call_operand.hbm [shape: f32[8,1024], index: 5, kind: output, shape index: {0}, may-alias: {0,5}]
  %s6 = inlined_call_operand.hbm [shape: f32[8,1024], index: 6, kind: output, shape index: {1}, may-alias: {1,6}]
  %7 = xla_tuple %s5, %s6
  %s8 = sld [smem:[#allocation0]]
  $region69: #{tpu_custom_call.1} parent=0
    _
  %s10 = ssub.s32 1, %s8
  %s11 = scalar_select 0, %s10, %s8
  $region1: #{tpu_custom_call.1} parent=0
    #allocation2 [shape = 'u8[8192]{0}', space=vmem, size = 0x2000, scoped, tag = 'input window, operand 0']
    #allocation3 [shape = 's32[2]{0}', space=sflag, size = 0x8, scoped, tag = 'scoped memory for tpu_custom_call.1']
    #allocation4 [shape = 's32[2]{0}', space=sflag, size = 0x8, scoped, tag = 'scoped memory for tpu_custom_call.1']
    #allocation5 [shape = 'u8[8192]{0}', space=vmem, size = 0x2000, scoped, tag = 'input window, operand 1']
    #allocation6 [shape = 's32[2]{0}', space=sflag, size = 0x8, scoped, tag = 'scoped memory for tpu_custom_call.1']
    #allocation7 [shape = 'u8[8192]{0}', space=vmem, size = 0x2000, scoped, tag = 'output window, operand 0']
    #allocation8 [shape = 'u8[8192]{0}', space=vmem, size = 0x2000, scoped, tag = 'output window, operand 1']
    #allocation9 [shape = 's32[2]{0}', space=sflag, size = 0x8, scoped, tag = 'scoped memory for tpu_custom_call.1']
    %12 = vsyncpa [#allocation3], 0
    %s13 = scalar_lea.sflag [#allocation3], 1
    %14 = vsyncpa %s13, 0
    %15 = vsyncpa [#allocation6], 0
    %s16 = scalar_lea.sflag [#allocation6], 1
    %17 = vsyncpa %s16, 0
    %18 = vsyncpa [#allocation4], 0
    %s19 = scalar_lea.sflag [#allocation4], 1
    %20 = vsyncpa %s19, 0
    %21 = vsyncpa [#allocation9], 0
    %s22 = scalar_lea.sflag [#allocation9], 1
    %23 = vsyncpa %s22, 0
    loop: start=0, step=1, limit=10
    $region2: #{tpu_custom_call.1} parent=1 // loop_pre_header
      _
    $region3: #{tpu_custom_call.1} parent=1 // loop_header
      %s25 = sphi 0, %s29
      %p26 = scmp.ge.s32.totalorder %s25, 10
      %s32 = sphi 0, %s44
      %s33 = sphi 0, %s40
      %s34 = sphi 0, %s32
      %s35 = sphi 0, %s33
      %s36 = sphi 0, %s34
      %s37 = sphi 0, %s35
      %s49 = sphi 0, %s51
      %s52 = sphi 0, %s49
      %s53 = sphi 0, %s52
      %s69 = sphi 0, %s53
      %s77 = sphi 0, %s79
      %s80 = sphi 0, %s77
      %s81 = sphi 0, %s80
      %s97 = sphi 0, %s81
      %s103 = sphi 0, %s105
      %s106 = sphi 0, %s103
      %s107 = sphi 0, %s106
      %s123 = sphi 0, %s107
      %s129 = sphi 0, %s131
      %s132 = sphi 0, %s129
      %s133 = sphi 0, %s132
      %s149 = sphi 0, %s133
      %s155 = sphi 0, %s157
      %s158 = sphi 0, %s155
      %s159 = sphi 0, %s158
      %s175 = sphi 0, %s159
      %s183 = sphi 0, %s185
      %s186 = sphi 0, %s183
      %s187 = sphi 0, %s186
      %s203 = sphi 0, %s187
      %s211 = sphi 0, %s213
      %s214 = sphi 0, %s211
      %s215 = sphi 0, %s214
      %s231 = sphi 0, %s215
    $region4: #{tpu_custom_call.1} parent=1 // loop_header_branch
      %28 = sbr.rel (%p26) target = $region8
    $region5: #{tpu_custom_call.1} parent=1 // loop_body
      %s30 = ssub.s32 %s25, 1
      %s31 = ssub.s32 %s25, 2
      %s38 = sadd.s32 1, %s33
      %p39 = scmp.ge.s32.totalorder %s38, 1
      %s40 = scalar_select %p39, 0, %s38
      %s41 = sadd.s32 1, %s32
      %s42 = scalar_select %p39, %s41, %s32
      %p43 = scmp.ge.s32.totalorder %s42, 8
      %s44 = scalar_select %p43, 0, %s42
      %s45 = ssub.s32 %s33, %s40
      %s46 = ssub.s32 %s32, %s44
      %s47 = sor.u32 %s45, %s46
      %p48 = scmp.eq.s32.totalorder %s47, 0
      %s50 = sadd.s32 %s49, 1
      %s51 = scalar_select %p48, %s49, %s50
      %p54 = pneg %p48
      %p55 = scmp.eq.s32.totalorder %s25, 7
      %p56 = por %p54, %p55
      %p57 = scmp.ne.s32.totalorder %s49, %s52
      %p58 = scmp.eq.s32.totalorder %s25, 0
      %p59 = por %p57, %p58
      %p60 = scmp.ne.s32.totalorder %s49, %s52
      %p61 = scmp.eq.s32.totalorder %s30, 7
      %p62 = por %p60, %p61
      %p63 = scmp.ne.s32.totalorder %s52, %s53
      %p64 = scmp.eq.s32.totalorder %s30, 0
      %p65 = por %p63, %p64
      %p66 = scmp.ne.s32.totalorder %s52, %s53
      %p67 = scmp.eq.s32.totalorder %s31, 7
      %p68 = por %p66, %p67
      %p70 = scmp.ne.s32.totalorder %s53, %s69
      %p71 = scmp.eq.s32.totalorder %s31, 0
      %p72 = por %p70, %p71
      %s73 = ssub.s32 %s33, %s40
      %s74 = ssub.s32 %s32, %s44
      %s75 = sor.u32 %s73, %s74
      %p76 = scmp.eq.s32.totalorder %s75, 0
      %s78 = sadd.s32 %s77, 1
      %s79 = scalar_select %p76, %s77, %s78
      %p82 = pneg %p76
      %p83 = scmp.eq.s32.totalorder %s25, 7
      %p84 = por %p82, %p83
      %p85 = scmp.ne.s32.totalorder %s77, %s80
      %p86 = scmp.eq.s32.totalorder %s25, 0
      %p87 = por %p85, %p86
      %p88 = scmp.ne.s32.totalorder %s77, %s80
      %p89 = scmp.eq.s32.totalorder %s30, 7
      %p90 = por %p88, %p89
      %p91 = scmp.ne.s32.totalorder %s80, %s81
      %p92 = scmp.eq.s32.totalorder %s30, 0
      %p93 = por %p91, %p92
      %p94 = scmp.ne.s32.totalorder %s80, %s81
      %p95 = scmp.eq.s32.totalorder %s31, 7
      %p96 = por %p94, %p95
      %p98 = scmp.ne.s32.totalorder %s81, %s97
      %p99 = scmp.eq.s32.totalorder %s31, 0
      %p100 = por %p98, %p99
      %s101 = ssub.s32 %s32, %s44
      %p102 = scmp.eq.s32.totalorder %s101, 0
      %s104 = sadd.s32 %s103, 1
      %s105 = scalar_select %p102, %s103, %s104
      %p108 = pneg %p102
      %p109 = scmp.eq.s32.totalorder %s25, 7
      %p110 = por %p108, %p109
      %p111 = scmp.ne.s32.totalorder %s103, %s106
      %p112 = scmp.eq.s32.totalorder %s25, 0
      %p113 = por %p111, %p112
      %p114 = scmp.ne.s32.totalorder %s103, %s106
      %p115 = scmp.eq.s32.totalorder %s30, 7
      %p116 = por %p114, %p115
      %p117 = scmp.ne.s32.totalorder %s106, %s107
      %p118 = scmp.eq.s32.totalorder %s30, 0
      %p119 = por %p117, %p118
      %p120 = scmp.ne.s32.totalorder %s106, %s107
      %p121 = scmp.eq.s32.totalorder %s31, 7
      %p122 = por %p120, %p121
      %p124 = scmp.ne.s32.totalorder %s107, %s123
      %p125 = scmp.eq.s32.totalorder %s31, 0
      %p126 = por %p124, %p125
      %s127 = ssub.s32 %s32, %s44
      %p128 = scmp.eq.s32.totalorder %s127, 0
      %s130 = sadd.s32 %s129, 1
      %s131 = scalar_select %p128, %s129, %s130
      %p134 = pneg %p128
      %p135 = scmp.eq.s32.totalorder %s25, 7
      %p136 = por %p134, %p135
      %p137 = scmp.ne.s32.totalorder %s129, %s132
      %p138 = scmp.eq.s32.totalorder %s25, 0
      %p139 = por %p137, %p138
      %p140 = scmp.ne.s32.totalorder %s129, %s132
      %p141 = scmp.eq.s32.totalorder %s30, 7
      %p142 = por %p140, %p141
      %p143 = scmp.ne.s32.totalorder %s132, %s133
      %p144 = scmp.eq.s32.totalorder %s30, 0
      %p145 = por %p143, %p144
      %p146 = scmp.ne.s32.totalorder %s132, %s133
      %p147 = scmp.eq.s32.totalorder %s31, 7
      %p148 = por %p146, %p147
      %p150 = scmp.ne.s32.totalorder %s133, %s149
      %p151 = scmp.eq.s32.totalorder %s31, 0
      %p152 = por %p150, %p151
      %s153 = ssub.s32 %s32, %s44
      %p154 = scmp.eq.s32.totalorder %s153, 0
      %s156 = sadd.s32 %s155, 1
      %s157 = scalar_select %p154, %s155, %s156
      %p160 = pneg %p154
      %p161 = scmp.eq.s32.totalorder %s25, 7
      %p162 = por %p160, %p161
      %p163 = scmp.ne.s32.totalorder %s155, %s158
      %p164 = scmp.eq.s32.totalorder %s25, 0
      %p165 = por %p163, %p164
      %p166 = scmp.ne.s32.totalorder %s155, %s158
      %p167 = scmp.eq.s32.totalorder %s30, 7
      %p168 = por %p166, %p167
      %p169 = scmp.ne.s32.totalorder %s158, %s159
      %p170 = scmp.eq.s32.totalorder %s30, 0
      %p171 = por %p169, %p170
      %p172 = scmp.ne.s32.totalorder %s158, %s159
      %p173 = scmp.eq.s32.totalorder %s31, 7
      %p174 = por %p172, %p173
      %p176 = scmp.ne.s32.totalorder %s159, %s175
      %p177 = scmp.eq.s32.totalorder %s31, 0
      %p178 = por %p176, %p177
      %s179 = ssub.s32 %s33, %s40
      %s180 = ssub.s32 %s32, %s44
      %s181 = sor.u32 %s179, %s180
      %p182 = scmp.eq.s32.totalorder %s181, 0
      %s184 = sadd.s32 %s183, 1
      %s185 = scalar_select %p182, %s183, %s184
      %p188 = pneg %p182
      %p189 = scmp.eq.s32.totalorder %s25, 7
      %p190 = por %p188, %p189
      %p191 = scmp.ne.s32.totalorder %s183, %s186
      %p192 = scmp.eq.s32.totalorder %s25, 0
      %p193 = por %p191, %p192
      %p194 = scmp.ne.s32.totalorder %s183, %s186
      %p195 = scmp.eq.s32.totalorder %s30, 7
      %p196 = por %p194, %p195
      %p197 = scmp.ne.s32.totalorder %s186, %s187
      %p198 = scmp.eq.s32.totalorder %s30, 0
      %p199 = por %p197, %p198
      %p200 = scmp.ne.s32.totalorder %s186, %s187
      %p201 = scmp.eq.s32.totalorder %s31, 7
      %p202 = por %p200, %p201
      %p204 = scmp.ne.s32.totalorder %s187, %s203
      %p205 = scmp.eq.s32.totalorder %s31, 0
      %p206 = por %p204, %p205
      %s207 = ssub.s32 %s33, %s40
      %s208 = ssub.s32 %s32, %s44
      %s209 = sor.u32 %s207, %s208
      %p210 = scmp.eq.s32.totalorder %s209, 0
      %s212 = sadd.s32 %s211, 1
      %s213 = scalar_select %p210, %s211, %s212
      %p216 = pneg %p210
      %p217 = scmp.eq.s32.totalorder %s25, 7
      %p218 = por %p216, %p217
      %p219 = scmp.ne.s32.totalorder %s211, %s214
      %p220 = scmp.eq.s32.totalorder %s25, 0
      %p221 = por %p219, %p220
      %p222 = scmp.ne.s32.totalorder %s211, %s214
      %p223 = scmp.eq.s32.totalorder %s30, 7
      %p224 = por %p222, %p223
      %p225 = scmp.ne.s32.totalorder %s214, %s215
      %p226 = scmp.eq.s32.totalorder %s30, 0
      %p227 = por %p225, %p226
      %p228 = scmp.ne.s32.totalorder %s214, %s215
      %p229 = scmp.eq.s32.totalorder %s31, 7
      %p230 = por %p228, %p229
      %p232 = scmp.ne.s32.totalorder %s215, %s231
      %p233 = scmp.eq.s32.totalorder %s31, 0
      %p234 = por %p232, %p233
      %p235 = scmp.le.s32.totalorder 1, %s25
      %p236 = scmp.lt.s32.totalorder %s25, 9
      %p237 = pnand %p235, %p236
      %p238 = pneg %p237
      // Predicated region
      $region9: #{tpu_custom_call.1} parent=5 // pred_check
        _
      $region10: #{tpu_custom_call.1} parent=5 // pred_check_branch
        %240 = sbr.rel (%p237) target = $region12
      $region11: #{tpu_custom_call.1} parent=5 // pred_region
        %s241 = ssub.s32 %s25, 1
      $region12: #{tpu_custom_call.1} parent=5 // pred_fallthru
        _
      %p242 = scmp.lt.s32.totalorder %s25, 8
      // Predicated region
      $region13: #{tpu_custom_call.1} parent=5 // pred_check
        %p243 = pneg %p242
      $region14: #{tpu_custom_call.1} parent=5 // pred_check_branch
        %245 = sbr.rel (%p243) target = $region16
      $region15: #{tpu_custom_call.1} parent=5 // pred_region
        // Predicated region
        $region17: #{tpu_custom_call.1} parent=15 // pred_check
          %p246 = pneg %p59
        $region18: #{tpu_custom_call.1} parent=15 // pred_check_branch
          %248 = sbr.rel (%p246) target = $region20
        $region19: #{tpu_custom_call.1} parent=15 // pred_region
          %s249 = sand.u32 %s49, 1
          %s250 = scalar_lea.sflag [#allocation3], %s249
          %s251 = sand.u32 %s49, 1
          %s252 = smul.addr %s251, 8
          %s253 = scalar_lea.vmem [#allocation2], %s252
          %s255 = ssub.s32 128, 128
          %256 = vsyncadd %s250, %s255
          %s257 = smul.addr %s33, 8
          %s258 = sadd.s32 %s32, %s257
          %s259 = smul.addr %s258, 128
          %s260 = scalar_lea.hbm %s0, %s259
          %s262 = sshll.u32 %s253, 4
          %s263 = int_to_ptr.vmem [resolvable:$true] %s262
          %265 = dma.hbm_to_vmem [thread:$0]  %s260, 128, %s263, %s250
        $region20: #{tpu_custom_call.1} parent=15 // pred_fallthru
          _
        // Predicated region
        $region21: #{tpu_custom_call.1} parent=15 // pred_check
          %p266 = pneg %p87
        $region22: #{tpu_custom_call.1} parent=15 // pred_check_branch
          %268 = sbr.rel (%p266) target = $region24
        $region23: #{tpu_custom_call.1} parent=15 // pred_region
          %s269 = sand.u32 %s77, 1
          %s270 = scalar_lea.sflag [#allocation6], %s269
          %s271 = sand.u32 %s77, 1
          %s272 = smul.addr %s271, 8
          %s273 = scalar_lea.vmem [#allocation5], %s272
          %s275 = ssub.s32 128, 128
          %276 = vsyncadd %s270, %s275
          %s277 = smul.addr %s33, 8
          %s278 = sadd.s32 %s32, %s277
          %s279 = smul.addr %s278, 128
          %s280 = scalar_lea.hbm %s1, %s279
          %s282 = sshll.u32 %s273, 4
          %s283 = int_to_ptr.vmem [resolvable:$true] %s282
          %285 = dma.hbm_to_vmem [thread:$0]  %s280, 128, %s283, %s270
        $region24: #{tpu_custom_call.1} parent=15 // pred_fallthru
          _
        // Predicated region
        $region25: #{tpu_custom_call.1} parent=15 // pred_check
          %p286 = pneg %p113
        $region26: #{tpu_custom_call.1} parent=15 // pred_check_branch
          %288 = sbr.rel (%p286) target = $region28
        $region27: #{tpu_custom_call.1} parent=15 // pred_region
          %p289 = scmp.lt.s32.totalorder %s32, 7
          %s290 = scalar_select %p289, %s32, 7
          %s291 = scalar_lea.vmem %s2, %s290
        $region28: #{tpu_custom_call.1} parent=15 // pred_fallthru
          _
        // Predicated region
        $region29: #{tpu_custom_call.1} parent=15 // pred_check
          %p292 = pneg %p139
        $region30: #{tpu_custom_call.1} parent=15 // pred_check_branch
          %294 = sbr.rel (%p292) target = $region32
        $region31: #{tpu_custom_call.1} parent=15 // pred_region
          %p295 = scmp.lt.s32.totalorder %s32, 7
          %s296 = scalar_select %p295, %s32, 7
          %s297 = scalar_lea.vmem %s3, %s296
        $region32: #{tpu_custom_call.1} parent=15 // pred_fallthru
          _
        // Predicated region
        $region33: #{tpu_custom_call.1} parent=15 // pred_check
          %p298 = pneg %p165
        $region34: #{tpu_custom_call.1} parent=15 // pred_check_branch
          %300 = sbr.rel (%p298) target = $region36
        $region35: #{tpu_custom_call.1} parent=15 // pred_region
          %p301 = scmp.lt.s32.totalorder %s32, 7
          %s302 = scalar_select %p301, %s32, 7
          %s303 = scalar_lea.vmem %s4, %s302
        $region36: #{tpu_custom_call.1} parent=15 // pred_fallthru
          _
      $region16: #{tpu_custom_call.1} parent=5 // pred_fallthru
        _
      %p304 = scmp.le.s32.totalorder 1, %s25
      %p305 = scmp.lt.s32.totalorder %s25, 9
      %p306 = pnand %p304, %p305
      %p307 = pneg %p306
      // Predicated region
      $region37: #{tpu_custom_call.1} parent=5 // pred_check
        _
      $region38: #{tpu_custom_call.1} parent=5 // pred_check_branch
        %309 = sbr.rel (%p306) target = $region40
      $region39: #{tpu_custom_call.1} parent=5 // pred_region
        %s310 = ssub.s32 %s25, 1
        %s311 = sand.u32 %s52, 1
        %s312 = scalar_lea.sflag [#allocation3], %s311
        %s313 = sand.u32 %s52, 1
        %s314 = smul.addr %s313, 8
        %s315 = scalar_lea.vmem [#allocation2], %s314
        // Predicated region
        $region41: #{tpu_custom_call.1} parent=39 // pred_check
          %p316 = pneg %p65
        $region42: #{tpu_custom_call.1} parent=39 // pred_check_branch
          %318 = sbr.rel (%p316) target = $region44
        $region43: #{tpu_custom_call.1} parent=39 // pred_region
          %319 = dma.done %s312, 128
        $region44: #{tpu_custom_call.1} parent=39 // pred_fallthru
          _
        %s320 = sand.u32 %s80, 1
        %s321 = scalar_lea.sflag [#allocation6], %s320
        %s322 = sand.u32 %s80, 1
        %s323 = smul.addr %s322, 8
        %s324 = scalar_lea.vmem [#allocation5], %s323
        // Predicated region
        $region45: #{tpu_custom_call.1} parent=39 // pred_check
          %p325 = pneg %p93
        $region46: #{tpu_custom_call.1} parent=39 // pred_check_branch
          %327 = sbr.rel (%p325) target = $region48
        $region47: #{tpu_custom_call.1} parent=39 // pred_region
          %328 = dma.done %s321, 128
        $region48: #{tpu_custom_call.1} parent=39 // pred_fallthru
          _
        %s329 = sand.u32 %s52, 1
        %s330 = scalar_lea.sflag [#allocation3], %s329
        %s331 = sand.u32 %s52, 1
        %s332 = smul.addr %s331, 8
        %s333 = scalar_lea.vmem [#allocation2], %s332
        %p334 = pneg %p65
        %p335 = pneg %p62
        %s336 = sand.u32 %s80, 1
        %s337 = scalar_lea.sflag [#allocation6], %s336
        %s338 = sand.u32 %s80, 1
        %s339 = smul.addr %s338, 8
        %s340 = scalar_lea.vmem [#allocation5], %s339
        %p341 = pneg %p93
        %p342 = pneg %p90
        %p343 = scmp.lt.s32.totalorder %s34, 7
        %s344 = scalar_select %p343, %s34, 7
        %s345 = scalar_lea.vmem %s2, %s344
        %p346 = pneg %p119
        %p347 = pneg %p116
        %p348 = scmp.lt.s32.totalorder %s34, 7
        %s349 = scalar_select %p348, %s34, 7
        %s350 = scalar_lea.vmem %s3, %s349
        %p351 = pneg %p145
        %p352 = pneg %p142
        %p353 = scmp.lt.s32.totalorder %s34, 7
        %s354 = scalar_select %p353, %s34, 7
        %s355 = scalar_lea.vmem %s4, %s354
        %p356 = pneg %p171
        %p357 = pneg %p168
        %p358 = pneg %p199
        %p359 = pneg %p196
        %s360 = sand.u32 %s186, 1
        %s361 = scalar_lea.sflag [#allocation4], %s360
        %s362 = sand.u32 %s186, 1
        %s363 = smul.addr %s362, 8
        %s364 = scalar_lea.vmem [#allocation7], %s363
        %p365 = pneg %p227
        %p366 = pneg %p224
        %s367 = sand.u32 %s214, 1
        %s368 = scalar_lea.sflag [#allocation9], %s367
        %s369 = sand.u32 %s214, 1
        %s370 = smul.addr %s369, 8
        %s371 = scalar_lea.vmem [#allocation8], %s370
        %p372 = scmp.lt.s32.totalorder %s34, 7
        %s373 = scalar_select %p372, %s34, 7
        %s374 = scalar_lea.vmem %s2, %s373
        %p375 = scmp.lt.s32.totalorder %s34, 7
        %s376 = scalar_select %p375, %s34, 7
        %s377 = scalar_lea.vmem %s3, %s376
        %p378 = scmp.lt.s32.totalorder %s34, 7
        %s379 = scalar_select %p378, %s34, 7
        %s380 = scalar_lea.vmem %s4, %s379
        %v381 = vld [vmem:[%s374] sm:$0x1]
        %v382 = vld [vmem:[%s377] sm:$0x1]
        %v383 = vld [vmem:[%s380] sm:$0x1]
        %v384 = vld [vmem:[%s315] sm:$0xff]
        %385 = vrot.lane.b32.xlu0 %v384, 32
        %v386 = vpop.permute.xlu0 %385
        %387 = vrot.lane.b32.xlu0 %v384, 96
        %v388 = vpop.permute.xlu0 %387
        %v390 = vlaneseq
        %v391 = vshrl.u32 %v390, 7
        %v392 = vsub.s32 0, %v391
        %v393 = vrot.slane %v381, %v392
        %v395 = vmul.f32 %v384, %v393
        %v397 = vlaneseq
        %v398 = vshrl.u32 %v397, 7
        %v399 = vsub.s32 0, %v398
        %v400 = vrot.slane %v382, %v399
        %v402 = vmul.f32 %v388, %v400
        %v403 = vadd.f32 %v395, %v402
        %v405 = vlaneseq
        %v406 = vshrl.u32 %v405, 7
        %v407 = vsub.s32 0, %v406
        %v408 = vrot.slane %v383, %v407
        %v410 = vmul.f32 %v386, %v408
        %v411 = vadd.f32 %v403, %v410
        %412 = vst [vmem:[%s364] sm:$0xff] %v411
        %v413 = vld [vmem:[%s324] sm:$0xff]
        %414 = vrot.lane.b32.xlu0 %v413, 32
        %v415 = vpop.permute.xlu0 %414
        %416 = vrot.lane.b32.xlu0 %v413, 96
        %v417 = vpop.permute.xlu0 %416
        %v418 = vmul.f32 %v413, %v393
        %v419 = vmul.f32 %v417, %v400
        %v420 = vadd.f32 %v418, %v419
        %v421 = vmul.f32 %v415, %v408
        %v422 = vadd.f32 %v420, %v421
        %423 = vst [vmem:[%s371] sm:$0xff] %v422
        %s424 = sand.u32 %s186, 1
        %s425 = scalar_lea.sflag [#allocation4], %s424
        %s426 = sand.u32 %s186, 1
        %s427 = smul.addr %s426, 8
        %s428 = scalar_lea.vmem [#allocation7], %s427
        %s429 = sand.u32 %s214, 1
        %s430 = scalar_lea.sflag [#allocation9], %s429
        %s431 = sand.u32 %s214, 1
        %s432 = smul.addr %s431, 8
        %s433 = scalar_lea.vmem [#allocation8], %s432
        // Predicated region
        $region49: #{tpu_custom_call.1} parent=39 // pred_check
          %p434 = pneg %p196
        $region50: #{tpu_custom_call.1} parent=39 // pred_check_branch
          %436 = sbr.rel (%p434) target = $region52
        $region51: #{tpu_custom_call.1} parent=39 // pred_region
          %s438 = ssub.s32 128, 128
          %439 = vsyncadd %s425, %s438
          %s440 = smul.addr %s35, 8
          %s441 = sadd.s32 %s34, %s440
          %s442 = smul.addr %s441, 128
          %s443 = scalar_lea.hbm %s5, %s442
          %s445 = sshll.u32 %s428, 4
          %s446 = int_to_ptr.vmem [resolvable:$true] %s445
          %448 = dma.vmem_to_hbm [thread:$0]  %s446, 128, %s443, %s425
        $region52: #{tpu_custom_call.1} parent=39 // pred_fallthru
          _
        // Predicated region
        $region53: #{tpu_custom_call.1} parent=39 // pred_check
          %p449 = pneg %p224
        $region54: #{tpu_custom_call.1} parent=39 // pred_check_branch
          %451 = sbr.rel (%p449) target = $region56
        $region55: #{tpu_custom_call.1} parent=39 // pred_region
          %s453 = ssub.s32 128, 128
          %454 = vsyncadd %s430, %s453
          %s455 = smul.addr %s35, 8
          %s456 = sadd.s32 %s34, %s455
          %s457 = smul.addr %s456, 128
          %s458 = scalar_lea.hbm %s6, %s457
          %s460 = sshll.u32 %s433, 4
          %s461 = int_to_ptr.vmem [resolvable:$true] %s460
          %463 = dma.vmem_to_hbm [thread:$0]  %s461, 128, %s458, %s430
        $region56: #{tpu_custom_call.1} parent=39 // pred_fallthru
          _
      $region40: #{tpu_custom_call.1} parent=5 // pred_fallthru
        _
      %p464 = scmp.le.s32.totalorder 2, %s25
      // Predicated region
      $region57: #{tpu_custom_call.1} parent=5 // pred_check
        %p465 = pneg %p464
      $region58: #{tpu_custom_call.1} parent=5 // pred_check_branch
        %467 = sbr.rel (%p465) target = $region60
      $region59: #{tpu_custom_call.1} parent=5 // pred_region
        %s468 = ssub.s32 %s25, 2
        // Predicated region
        $region61: #{tpu_custom_call.1} parent=59 // pred_check
          %p469 = pneg %p202
        $region62: #{tpu_custom_call.1} parent=59 // pred_check_branch
          %471 = sbr.rel (%p469) target = $region64
        $region63: #{tpu_custom_call.1} parent=59 // pred_region
          %s472 = sand.u32 %s187, 1
          %s473 = scalar_lea.sflag [#allocation4], %s472
          %s474 = sand.u32 %s187, 1
          %s475 = smul.addr %s474, 8
          %s476 = scalar_lea.vmem [#allocation7], %s475
          %477 = dma.done %s473, 128
        $region64: #{tpu_custom_call.1} parent=59 // pred_fallthru
          _
        // Predicated region
        $region65: #{tpu_custom_call.1} parent=59 // pred_check
          %p478 = pneg %p230
        $region66: #{tpu_custom_call.1} parent=59 // pred_check_branch
          %480 = sbr.rel (%p478) target = $region68
        $region67: #{tpu_custom_call.1} parent=59 // pred_region
          %s481 = sand.u32 %s215, 1
          %s482 = scalar_lea.sflag [#allocation9], %s481
          %s483 = sand.u32 %s215, 1
          %s484 = smul.addr %s483, 8
          %s485 = scalar_lea.vmem [#allocation8], %s484
          %486 = dma.done %s482, 128
        $region68: #{tpu_custom_call.1} parent=59 // pred_fallthru
          _
      $region60: #{tpu_custom_call.1} parent=5 // pred_fallthru
        _
    $region6: #{tpu_custom_call.1} parent=1 // loop_footer
      %s29 = sadd.s32 1, %s25
    $region7: #{tpu_custom_call.1} parent=1 // loop_footer_branch
      %24 = sbr.rel target = $region3
    $region8: #{tpu_custom_call.1} parent=1 // loop_exit
      _
    %487 = vsyncpa [#allocation3], 1
    %s488 = scalar_lea.sflag [#allocation3], 1
    %489 = vsyncpa %s488, 1
    %490 = vsyncpa [#allocation6], 1
    %s491 = scalar_lea.sflag [#allocation6], 1
    %492 = vsyncpa %s491, 1
    %493 = vsyncpa [#allocation4], 1
    %s494 = scalar_lea.sflag [#allocation4], 1
    %495 = vsyncpa %s494, 1
    %496 = vsyncpa [#allocation9], 1
    %s497 = scalar_lea.sflag [#allocation9], 1
    %498 = vsyncpa %s497, 1

</llo_original>
